<compile_context>
chip_gen: v7x
topology: tpu7x:2x2x1
jax: 0.10.0
libtpu: 0.0.40
codegen_flags: <defaults>
</compile_context>

<pallas_src>
import math

import jax
import jax.numpy as jnp
from jax.experimental import pallas as pl
from jax.experimental.pallas import tpu as pltpu

H2_PAD = 128  # hidden_dim2 (100) padded up to a full vreg lane extent


def actor_kernel(x_ref, w1_ref, b1_ref, w2_ref, b2_ref, w3_ref, b3_ref, o_ref):
    # fc1 + relu  (bf16 operands, f32 accumulate; bias/relu in f32)
    x = x_ref[...].astype(jnp.bfloat16)
    h1 = jnp.dot(x, w1_ref[...], preferred_element_type=jnp.float32) + b1_ref[...]
    h1 = jnp.maximum(h1, 0.0)
    # fc2 + relu  (output width padded to 128; padded lanes are relu(0) = 0)
    h2 = jnp.dot(h1.astype(jnp.bfloat16), w2_ref[...],
                 preferred_element_type=jnp.float32) + b2_ref[...]
    h2 = jnp.maximum(h2, 0.0)
    # out + tanh  (K = 128 lane-aligned; N = action_dim -> tanh only on real lanes)
    y = jnp.dot(h2.astype(jnp.bfloat16), w3_ref[...],
                preferred_element_type=jnp.float32) + b3_ref[...]
    o_ref[...] = jnp.tanh(y).astype(o_ref.dtype)


def _pick_batch_tile(B, block_b):
    """Batch tile that divides B, is a multiple of 8 (sublane), is <= block_b,
    prefers multiples of 256 (MXU M dim), and yields >= 2 grid steps when the
    batch allows (so v7x's two TensorCores both get work)."""
    if B <= 8 or B % 8 != 0:
        # Single full-batch tile; block == full array dim satisfies layout rules.
        return B
    cap = min(block_b, B // 2)
    if cap < 8:
        return B
    best8, best256 = 8, 0
    for t in range(8, cap + 1, 8):
        if B % t == 0:
            best8 = t
            if t % 256 == 0:
                best256 = t
    if best256 > 0 and best256 * 2 >= best8:
        return best256
    return best8


def actor_forward(x, padded_params, action_dim, *, block_b=1024):
    """x: (B, n_features) float32. Returns (B, action_dim) float32."""
    B, n_features = x.shape
    w1, b1 = padded_params["w1"], padded_params["b1"]   # bf16 (nf, H1),  f32 (1, H1)
    w2, b2 = padded_params["w2"], padded_params["b2"]   # bf16 (H1, 128), f32 (1, 128)
    w3, b3 = padded_params["w3"], padded_params["b3"]   # bf16 (128, A),  f32 (1, A)
    H1 = w1.shape[1]
    H2P = w2.shape[1]

    tb = _pick_batch_tile(B, block_b)
    assert B % tb == 0, "batch must divide the batch tile"
    grid = (B // tb,)

    resident = lambda shape: pl.BlockSpec(shape, lambda i: (0, 0))

    flops = 2 * B * (n_features * H1 + H1 * H2P + H2P * action_dim)
    weight_bytes = (w1.size + w2.size + w3.size) * 2 \
                 + (b1.size + b2.size + b3.size) * 4
    bytes_accessed = x.size * 4 + weight_bytes + B * action_dim * 4

    return pl.pallas_call(
        actor_kernel,
        out_shape=jax.ShapeDtypeStruct((B, action_dim), jnp.float32),
        grid=grid,
        in_specs=[
            pl.BlockSpec((tb, n_features), lambda i: (i, 0)),  # x tile per grid step
            resident(w1.shape), resident(b1.shape),
            resident(w2.shape), resident(b2.shape),
            resident(w3.shape), resident(b3.shape),
        ],
        out_specs=pl.BlockSpec((tb, action_dim), lambda i: (i, 0)),
        compiler_params=pltpu.CompilerParams(
            dimension_semantics=("parallel",),
        ),
        cost_estimate=pl.CostEstimate(
            flops=flops,
            transcendentals=B * action_dim,
            bytes_accessed=bytes_accessed,
        ),
    )(x, w1, b1, w2, b2, w3, b3)


def init_params(key, action_dim, n_features,
                hidden_dim1=256, hidden_dim2=100, init_w=0.003):
    """Raw (unpadded, f32) params mirroring PyTorch defaults, stored (in, out):
    fc1/fc2 ~ U(-1/sqrt(fan_in), 1/sqrt(fan_in)); out ~ U(-init_w, init_w)."""
    k1, k2, k3, k4, k5, k6 = jax.random.split(key, 6)

    def uni(k, shape, bound):
        return jax.random.uniform(k, shape, jnp.float32, -bound, bound)

    b_fc1 = 1.0 / math.sqrt(n_features)
    b_fc2 = 1.0 / math.sqrt(hidden_dim1)
    return {
        "w1": uni(k1, (n_features, hidden_dim1), b_fc1),
        "b1": uni(k2, (1, hidden_dim1), b_fc1),
        "w2": uni(k3, (hidden_dim1, hidden_dim2), b_fc2),
        "b2": uni(k4, (1, hidden_dim2), b_fc2),
        "w3": uni(k5, (hidden_dim2, action_dim), init_w),
        "b3": uni(k6, (1, action_dim), init_w),
    }


def pad_params(params, weight_dtype=jnp.bfloat16):
    """Zero-pad hidden_dim2 -> 128 (K of the last matmul) and cast weights to
    bf16 once at init time.  Biases stay f32 (added post-accumulation)."""
    w2, b2 = params["w2"], params["b2"]
    w3 = params["w3"]
    h1, h2 = w2.shape
    w2p = jnp.zeros((h1, H2_PAD), jnp.float32).at[:, :h2].set(w2)
    b2p = jnp.zeros((1, H2_PAD), jnp.float32).at[:, :h2].set(b2)
    w3p = jnp.zeros((H2_PAD, w3.shape[1]), jnp.float32).at[:h2, :].set(w3)
    return {
        "w1": params["w1"].astype(weight_dtype), "b1": params["b1"],
        "w2": w2p.astype(weight_dtype),          "b2": b2p,
        "w3": w3p.astype(weight_dtype),          "b3": params["b3"],
    }


def actor_reference(x, params):
    """Pure-JAX f32 reference on the raw (unpadded) params."""
    h1 = jax.nn.relu(x @ params["w1"] + params["b1"])
    h2 = jax.nn.relu(h1 @ params["w2"] + params["b2"])
    return jnp.tanh(h2 @ params["w3"] + params["b3"])


if __name__ == "__main__":
    # Small shapes consistent with the module's forward:
    # batch=8, n_features=16, action_dim=4.
    B, N_FEATURES, ACTION_DIM = 8, 16, 4

    key = jax.random.PRNGKey(0)
    k_x, k_params, k_x2 = jax.random.split(key, 3)

    x = jax.random.normal(k_x, (B, N_FEATURES), jnp.float32)
    raw_params = init_params(k_params, ACTION_DIM, N_FEATURES)
    padded_params = pad_params(raw_params)

    out = jax.block_until_ready(actor_forward(x, padded_params, ACTION_DIM))
    ref = actor_reference(x, raw_params)
    assert out.shape == (B, ACTION_DIM), out.shape
    # bf16 matmul operands (f32 accumulate) -> compare at bf16-level tolerance.
    assert jnp.allclose(out, ref, atol=2e-2, rtol=2e-2), (out, ref)

    # Exercise the multi-step grid path (batch split across >= 2 grid steps).
    B2 = 32
    x2 = jax.random.normal(k_x2, (B2, N_FEATURES), jnp.float32)
    out2 = jax.block_until_ready(actor_forward(x2, padded_params, ACTION_DIM))
    ref2 = actor_reference(x2, raw_params)
    assert out2.shape == (B2, ACTION_DIM), out2.shape
    assert jnp.allclose(out2, ref2, atol=2e-2, rtol=2e-2), (out2, ref2)

    print("KERNEL_OK")
</pallas_src>

<mosaic_0001>
module attributes {stable_mosaic.version = 11 : i64} {
  func.func @actor_kernel(%arg0: i32, %arg1: memref<8x16xf32, #tpu.memory_space<vmem>>, %arg2: memref<16x256xbf16, #tpu.memory_space<vmem>>, %arg3: memref<1x256xf32, #tpu.memory_space<vmem>>, %arg4: memref<256x128xbf16, #tpu.memory_space<vmem>>, %arg5: memref<1x128xf32, #tpu.memory_space<vmem>>, %arg6: memref<128x4xbf16, #tpu.memory_space<vmem>>, %arg7: memref<1x4xf32, #tpu.memory_space<vmem>>, %arg8: memref<8x4xf32, #tpu.memory_space<vmem>>) attributes {dimension_semantics = [#tpu.dimension_semantics<parallel>], iteration_bounds = array<i64: 1>, scalar_prefetch = 0 : i64, scratch_operands = 0 : i64, tpu.core_type = #tpu.core_type<tc>, window_params = [{transform_indices = @transform_0, window_bounds = array<i64: 8, 16>}, {pipeline_mode = #tpu.pipeline_mode<synchronous>, transform_indices = @transform_1, window_bounds = array<i64: 16, 256>}, {pipeline_mode = #tpu.pipeline_mode<synchronous>, transform_indices = @transform_2, window_bounds = array<i64: 1, 256>}, {pipeline_mode = #tpu.pipeline_mode<synchronous>, transform_indices = @transform_3, window_bounds = array<i64: 256, 128>}, {pipeline_mode = #tpu.pipeline_mode<synchronous>, transform_indices = @transform_4, window_bounds = array<i64: 1, 128>}, {pipeline_mode = #tpu.pipeline_mode<synchronous>, transform_indices = @transform_5, window_bounds = array<i64: 128, 4>}, {pipeline_mode = #tpu.pipeline_mode<synchronous>, transform_indices = @transform_6, window_bounds = array<i64: 1, 4>}, {transform_indices = @transform_7, window_bounds = array<i64: 8, 4>}]} {
    %c0 = arith.constant 0 : index
    %c0_0 = arith.constant 0 : index
    %0 = vector.load %arg1[%c0, %c0_0] : memref<8x16xf32, #tpu.memory_space<vmem>>, vector<8x16xf32>
    %1 = arith.truncf %0 : vector<8x16xf32> to vector<8x16xbf16>
    %c0_1 = arith.constant 0 : index
    %c0_2 = arith.constant 0 : index
    %2 = vector.load %arg2[%c0_1, %c0_2] : memref<16x256xbf16, #tpu.memory_space<vmem>>, vector<16x256xbf16>
    %cst = arith.constant dense<0.000000e+00> : vector<8x256xf32>
    %3 = tpu.matmul %1, %2, %cst {dimension_numbers = #tpu.dot_dimension_numbers<[1], [0], [0], [1], [0, 0, 1, 1], [], []>} : vector<8x16xbf16>, vector<16x256xbf16>, vector<8x256xf32> -> vector<8x256xf32>
    %c0_3 = arith.constant 0 : index
    %c0_4 = arith.constant 0 : index
    %4 = vector.load %arg3[%c0_3, %c0_4] : memref<1x256xf32, #tpu.memory_space<vmem>>, vector<1x256xf32>
    %5 = vector.broadcast %4 : vector<1x256xf32> to vector<8x256xf32>
    %6 = arith.addf %3, %5 : vector<8x256xf32>
    %cst_5 = arith.constant 0.000000e+00 : f32
    %7 = vector.broadcast %cst_5 : f32 to vector<8x256xf32>
    %8 = arith.maximumf %6, %7 : vector<8x256xf32>
    %9 = arith.truncf %8 : vector<8x256xf32> to vector<8x256xbf16>
    %c0_6 = arith.constant 0 : index
    %c0_7 = arith.constant 0 : index
    %10 = vector.load %arg4[%c0_6, %c0_7] : memref<256x128xbf16, #tpu.memory_space<vmem>>, vector<256x128xbf16>
    %cst_8 = arith.constant dense<0.000000e+00> : vector<8x128xf32>
    %11 = tpu.matmul %9, %10, %cst_8 {dimension_numbers = #tpu.dot_dimension_numbers<[1], [0], [0], [1], [0, 0, 1, 1], [], []>} : vector<8x256xbf16>, vector<256x128xbf16>, vector<8x128xf32> -> vector<8x128xf32>
    %c0_9 = arith.constant 0 : index
    %c0_10 = arith.constant 0 : index
    %12 = vector.load %arg5[%c0_9, %c0_10] : memref<1x128xf32, #tpu.memory_space<vmem>>, vector<1x128xf32>
    %13 = vector.broadcast %12 : vector<1x128xf32> to vector<8x128xf32>
    %14 = arith.addf %11, %13 : vector<8x128xf32>
    %cst_11 = arith.constant 0.000000e+00 : f32
    %15 = vector.broadcast %cst_11 : f32 to vector<8x128xf32>
    %16 = arith.maximumf %14, %15 : vector<8x128xf32>
    %17 = arith.truncf %16 : vector<8x128xf32> to vector<8x128xbf16>
    %c0_12 = arith.constant 0 : index
    %c0_13 = arith.constant 0 : index
    %18 = vector.load %arg6[%c0_12, %c0_13] : memref<128x4xbf16, #tpu.memory_space<vmem>>, vector<128x4xbf16>
    %cst_14 = arith.constant dense<0.000000e+00> : vector<8x4xf32>
    %19 = tpu.matmul %17, %18, %cst_14 {dimension_numbers = #tpu.dot_dimension_numbers<[1], [0], [0], [1], [0, 0, 1, 1], [], []>} : vector<8x128xbf16>, vector<128x4xbf16>, vector<8x4xf32> -> vector<8x4xf32>
    %c0_15 = arith.constant 0 : index
    %c0_16 = arith.constant 0 : index
    %20 = vector.load %arg7[%c0_15, %c0_16] : memref<1x4xf32, #tpu.memory_space<vmem>>, vector<1x4xf32>
    %21 = vector.broadcast %20 : vector<1x4xf32> to vector<8x4xf32>
    %22 = arith.addf %19, %21 : vector<8x4xf32>
    %23 = math.tanh %22 : vector<8x4xf32>
    %c0_17 = arith.constant 0 : index
    %c0_18 = arith.constant 0 : index
    %24 = vector.load %arg8[%c0_17, %c0_18] : memref<8x4xf32, #tpu.memory_space<vmem>>, vector<8x4xf32>
    tpu.vector_store %arg8[%c0_17, %c0_18], %23 {strides = array<i32>} : memref<8x4xf32, #tpu.memory_space<vmem>>, vector<8x4xf32>,
    return
  }
  func.func @transform_0(%arg0: i32) -> (i32, i32) {
    %c0_i32 = arith.constant 0 : i32
    %c0_i32_0 = arith.constant 0 : i32
    return %arg0, %c0_i32 : i32, i32
  }
  func.func @transform_1(%arg0: i32) -> (i32, i32) {
    %c0_i32 = arith.constant 0 : i32
    %c0_i32_0 = arith.constant 0 : i32
    %c0_i32_1 = arith.constant 0 : i32
    return %c0_i32, %c0_i32_0 : i32, i32
  }
  func.func @transform_2(%arg0: i32) -> (i32, i32) {
    %c0_i32 = arith.constant 0 : i32
    %c0_i32_0 = arith.constant 0 : i32
    %c0_i32_1 = arith.constant 0 : i32
    return %c0_i32, %c0_i32_0 : i32, i32
  }
  func.func @transform_3(%arg0: i32) -> (i32, i32) {
    %c0_i32 = arith.constant 0 : i32
    %c0_i32_0 = arith.constant 0 : i32
    %c0_i32_1 = arith.constant 0 : i32
    return %c0_i32, %c0_i32_0 : i32, i32
  }
  func.func @transform_4(%arg0: i32) -> (i32, i32) {
    %c0_i32 = arith.constant 0 : i32
    %c0_i32_0 = arith.constant 0 : i32
    %c0_i32_1 = arith.constant 0 : i32
    return %c0_i32, %c0_i32_0 : i32, i32
  }
  func.func @transform_5(%arg0: i32) -> (i32, i32) {
    %c0_i32 = arith.constant 0 : i32
    %c0_i32_0 = arith.constant 0 : i32
    %c0_i32_1 = arith.constant 0 : i32
    return %c0_i32, %c0_i32_0 : i32, i32
  }
  func.func @transform_6(%arg0: i32) -> (i32, i32) {
    %c0_i32 = arith.constant 0 : i32
    %c0_i32_0 = arith.constant 0 : i32
    %c0_i32_1 = arith.constant 0 : i32
    return %c0_i32, %c0_i32_0 : i32, i32
  }
  func.func @transform_7(%arg0: i32) -> (i32, i32) {
    %c0_i32 = arith.constant 0 : i32
    %c0_i32_0 = arith.constant 0 : i32
    return %arg0, %c0_i32 : i32, i32
  }
}

</mosaic_0001>

<llo_original>
// kernel: tpu_custom_call.1
$region0: #{tpu_custom_call.1}
  #allocation0 [shape = 'u32[]', space=smem, size = 0x4, offset = 0x4, fixed_abs, tag = 'smem constant byte address 0x4 - core index']
  #allocation1 [shape = 'u32[144,128]{1,0:T(1,128)}', space=vmem, size = 0x12000, scoped, tag = 'internal scratch']
  %s0 = inlined_call_operand.vmem [shape: f32[8,16], index: 0, kind: input, shape index: {}]
  %s1 = inlined_call_operand.vmem [shape: bf16[16,256], index: 1, kind: input, shape index: {}]
  %s2 = inlined_call_operand.vmem [shape: f32[1,256], index: 2, kind: input, shape index: {}]
  %s3 = inlined_call_operand.hbm [shape: bf16[256,128], index: 3, kind: input, shape index: {}]
  %s4 = inlined_call_operand.vmem [shape: f32[1,128], index: 4, kind: input, shape index: {}]
  %s5 = inlined_call_operand.vmem [shape: bf16[128,4], index: 5, kind: input, shape index: {}]
  %s6 = inlined_call_operand.vmem [shape: f32[1,4], index: 6, kind: input, shape index: {}]
  %s7 = inlined_call_operand.vmem [shape: f32[8,4], index: 7, kind: output, shape index: {}]
  %s8 = sld [smem:[#allocation0]]
  $region42: #{tpu_custom_call.1} parent=0
    _
  %s10 = ssub.s32 1, %s8
  %s11 = scalar_select 0, %s10, %s8
  $region1: #{tpu_custom_call.1} parent=0
    #allocation2 [shape = 'u8[65536]{0}', space=vmem, size = 0x10000, scoped, tag = 'input window, operand 3, single buffered']
    #allocation3 [shape = 's32[1]{0}', space=sflag, size = 0x4, scoped, tag = 'scoped memory for tpu_custom_call.1']
    %12 = vsyncpa [#allocation3], 0
    // Predicated region
    $region2: #{tpu_custom_call.1} parent=1 // pred_check
      _
    $region3: #{tpu_custom_call.1} parent=1 // pred_check_branch
      %14 = sbr.rel (0) target = $region5
    $region4: #{tpu_custom_call.1} parent=1 // pred_region
      _
    $region5: #{tpu_custom_call.1} parent=1 // pred_fallthru
      _
    // Predicated region
    $region6: #{tpu_custom_call.1} parent=1 // pred_check
      _
    $region7: #{tpu_custom_call.1} parent=1 // pred_check_branch
      %16 = sbr.rel (0) target = $region9
    $region8: #{tpu_custom_call.1} parent=1 // pred_region
      _
    $region9: #{tpu_custom_call.1} parent=1 // pred_fallthru
      _
    // Predicated region
    $region10: #{tpu_custom_call.1} parent=1 // pred_check
      _
    $region11: #{tpu_custom_call.1} parent=1 // pred_check_branch
      %18 = sbr.rel (0) target = $region13
    $region12: #{tpu_custom_call.1} parent=1 // pred_region
      _
    $region13: #{tpu_custom_call.1} parent=1 // pred_fallthru
      _
    // Predicated region
    $region14: #{tpu_custom_call.1} parent=1 // pred_check
      _
    $region15: #{tpu_custom_call.1} parent=1 // pred_check_branch
      %20 = sbr.rel (0) target = $region17
    $region16: #{tpu_custom_call.1} parent=1 // pred_region
      %s22 = ssub.s32 2048, 2048
      %23 = vsyncadd [#allocation3], %s22
      %s24 = sshll.u32 [#allocation2], 4
      %s25 = int_to_ptr.vmem [resolvable:$true] %s24
      %30 = dma.hbm_to_vmem [thread:$0]  %s3, 2048, %s25, [#allocation3], 64, 64, 4
    $region17: #{tpu_custom_call.1} parent=1 // pred_fallthru
      _
    // Predicated region
    $region18: #{tpu_custom_call.1} parent=1 // pred_check
      _
    $region19: #{tpu_custom_call.1} parent=1 // pred_check_branch
      %32 = sbr.rel (0) target = $region21
    $region20: #{tpu_custom_call.1} parent=1 // pred_region
      _
    $region21: #{tpu_custom_call.1} parent=1 // pred_fallthru
      _
    // Predicated region
    $region22: #{tpu_custom_call.1} parent=1 // pred_check
      _
    $region23: #{tpu_custom_call.1} parent=1 // pred_check_branch
      %34 = sbr.rel (0) target = $region25
    $region24: #{tpu_custom_call.1} parent=1 // pred_region
      _
    $region25: #{tpu_custom_call.1} parent=1 // pred_fallthru
      _
    // Predicated region
    $region26: #{tpu_custom_call.1} parent=1 // pred_check
      _
    $region27: #{tpu_custom_call.1} parent=1 // pred_check_branch
      %36 = sbr.rel (0) target = $region29
    $region28: #{tpu_custom_call.1} parent=1 // pred_region
      _
    $region29: #{tpu_custom_call.1} parent=1 // pred_fallthru
      _
    // Predicated region
    $region30: #{tpu_custom_call.1} parent=1 // pred_check
      _
    $region31: #{tpu_custom_call.1} parent=1 // pred_check_branch
      %38 = sbr.rel (0) target = $region33
    $region32: #{tpu_custom_call.1} parent=1 // pred_region
      %39 = dma.done [#allocation3], 2048
    $region33: #{tpu_custom_call.1} parent=1 // pred_fallthru
      _
    %v41 = vld [vmem:[%s0] sm:$0xff]
    %v42 = vpack.c.bf16 %v41, %v41
    %v43 = vld [vmem:[%s1] sm:$0xff]
    %v44 = vld [vmem:[%s1 + $0x8] sm:$0xff]
    %v45 = vld [vmem:[%s2] sm:$0x3]
    %v47 = vlaneseq
    %v48 = vshrl.u32 %v47, 7
    %v49 = vsub.s32 0, %v48
    %v50 = vrot.slane %v45, %v49
    %v51 = vlaneseq
    %v52 = vshrl.u32 %v51, 7
    %v53 = vsub.s32 1, %v52
    %v54 = vrot.slane %v45, %v53
    %v59 = vunpack.c.l.b16 %v43
    %v60 = vunpack.c.h.b16 %v43
    %v61 = vunpack.c.l.b16 %v44
    %v62 = vunpack.c.h.b16 %v44
    %v63 = vpack.c.b16 %v61, %v59
    %v64 = vpack.c.b16 %v62, %v60
    %vm67 = vcmask 130048
    %v69 = vsel %vm67, %v42, 0
    %71 = vmatprep.subr.bf16.mxu0 %v64
    %72 = vmatpush1.bf16.msra.mxu0 %v63
    %73 = vmatprep.subr.bf16.mxu0 0
    %74 = vmatpush1.bf16.msra.mxu0 0
    %75 = vmatprep.subr.bf16.mxu0 0
    %76 = vmatpush1.bf16.msra.mxu0 0
    %77 = vmatprep.subr.bf16.mxu0 0
    %78 = vmatpush1.bf16.msra.mxu0 0
    %79 = vmatprep.subr.bf16.mxu0 0
    %80 = vmatpush1.bf16.msra.mxu0 0
    %81 = vmatprep.subr.bf16.mxu0 0
    %82 = vmatpush1.bf16.msra.mxu0 0
    %83 = vmatprep.subr.bf16.mxu0 0
    %84 = vmatpush1.bf16.msra.mxu0 0
    %85 = vmatprep.subr.bf16.mxu0 0
    %86 = vmatpush1.bf16.msra.mxu0 0
    %87 = vmatprep.subr.bf16.mxu0 0
    %88 = vmatpush1.bf16.msra.mxu0 0
    %89 = vmatprep.subr.bf16.mxu0 0
    %90 = vmatpush1.bf16.msra.mxu0 0
    %91 = vmatprep.subr.bf16.mxu0 0
    %92 = vmatpush1.bf16.msra.mxu0 0
    %93 = vmatprep.subr.bf16.mxu0 0
    %94 = vmatpush1.bf16.msra.mxu0 0
    %95 = vmatprep.subr.bf16.mxu0 0
    %96 = vmatpush1.bf16.msra.mxu0 0
    %97 = vmatprep.subr.bf16.mxu0 0
    %98 = vmatpush1.bf16.msra.mxu0 0
    %99 = vmatprep.subr.bf16.mxu0 0
    %100 = vmatpush1.bf16.msra.mxu0 0
    %101 = vmatprep.subr.bf16.mxu0 0
    %102 = vmatpush1.bf16.msra.mxu0 0
    %103 = vmatprep.mubr.bf16.mxu0 0
    %104 = vmatmul.mubr.bf16.gmra.mrb[0].mxu0 %v69
    %v105 = vpop.f32.mrb[0].mxu0
    %v106 = vadd.f32 %v50, %v105
    %v107 = vpop.f32.mrb[0].mxu0
    %v108 = vadd.f32 %v54, %v107
    %v109 = vpop.f32.mrb[0].mxu0
    %v110 = vpop.f32.mrb[0].mxu0
    %111 = vdwg.mxu0
    %v112 = vmax.f32 %v106, 0.0
    %v113 = vmax.f32 %v108, 0.0
    %v114 = vpack.c.bf16 %v112, %v112
    %v115 = vpack.c.bf16 %v113, %v113
    %v116 = vld [vmem:[#allocation2] sm:$0xf]
    %v117 = vld [vmem:[#allocation2 + $0x4] sm:$0xf]
    %v118 = vld [vmem:[#allocation2 + $0x8] sm:$0xf]
    %v119 = vld [vmem:[#allocation2 + $0xc] sm:$0xf]
    %v120 = vld [vmem:[#allocation2 + $0x10] sm:$0xf]
    %v121 = vld [vmem:[#allocation2 + $0x14] sm:$0xf]
    %v122 = vld [vmem:[#allocation2 + $0x18] sm:$0xf]
    %v123 = vld [vmem:[#allocation2 + $0x1c] sm:$0xf]
    %v124 = vld [vmem:[#allocation2 + $0x20] sm:$0xf]
    %v125 = vld [vmem:[#allocation2 + $0x24] sm:$0xf]
    %v126 = vld [vmem:[#allocation2 + $0x28] sm:$0xf]
    %v127 = vld [vmem:[#allocation2 + $0x2c] sm:$0xf]
    %v128 = vld [vmem:[#allocation2 + $0x30] sm:$0xf]
    %v129 = vld [vmem:[#allocation2 + $0x34] sm:$0xf]
    %v130 = vld [vmem:[#allocation2 + $0x38] sm:$0xf]
    %v131 = vld [vmem:[#allocation2 + $0x3c] sm:$0xf]
    %v132 = vld [vmem:[#allocation2 + $0x40] sm:$0xf]
    %v133 = vld [vmem:[#allocation2 + $0x44] sm:$0xf]
    %v134 = vld [vmem:[#allocation2 + $0x48] sm:$0xf]
    %v135 = vld [vmem:[#allocation2 + $0x4c] sm:$0xf]
    %v136 = vld [vmem:[#allocation2 + $0x50] sm:$0xf]
    %v137 = vld [vmem:[#allocation2 + $0x54] sm:$0xf]
    %v138 = vld [vmem:[#allocation2 + $0x58] sm:$0xf]
    %v139 = vld [vmem:[#allocation2 + $0x5c] sm:$0xf]
    %v140 = vld [vmem:[#allocation2 + $0x60] sm:$0xf]
    %v141 = vld [vmem:[#allocation2 + $0x64] sm:$0xf]
    %v142 = vld [vmem:[#allocation2 + $0x68] sm:$0xf]
    %v143 = vld [vmem:[#allocation2 + $0x6c] sm:$0xf]
    %v144 = vld [vmem:[#allocation2 + $0x70] sm:$0xf]
    %v145 = vld [vmem:[#allocation2 + $0x74] sm:$0xf]
    %v146 = vld [vmem:[#allocation2 + $0x78] sm:$0xf]
    %v147 = vld [vmem:[#allocation2 + $0x7c] sm:$0xf]
    %v148 = vld [vmem:[%s4] sm:$0x1]
    %v150 = vlaneseq
    %v151 = vshrl.u32 %v150, 7
    %v152 = vsub.s32 0, %v151
    %v153 = vrot.slane %v148, %v152
    %v187 = vunpack.c.l.b16 %v116
    %v188 = vunpack.c.l.b16 %v117
    %v189 = vunpack.c.l.b16 %v118
    %v190 = vunpack.c.l.b16 %v119
    %v191 = vunpack.c.l.b16 %v120
    %v192 = vunpack.c.l.b16 %v121
    %v193 = vunpack.c.l.b16 %v122
    %v194 = vunpack.c.l.b16 %v123
    %v195 = vunpack.c.l.b16 %v124
    %v196 = vunpack.c.l.b16 %v125
    %v197 = vunpack.c.l.b16 %v126
    %v198 = vunpack.c.l.b16 %v127
    %v199 = vunpack.c.l.b16 %v128
    %v200 = vunpack.c.l.b16 %v129
    %v201 = vunpack.c.l.b16 %v130
    %v202 = vunpack.c.l.b16 %v131
    %v203 = vunpack.c.l.b16 %v132
    %v204 = vunpack.c.l.b16 %v133
    %v205 = vunpack.c.l.b16 %v134
    %v206 = vunpack.c.l.b16 %v135
    %v207 = vunpack.c.l.b16 %v136
    %v208 = vunpack.c.l.b16 %v137
    %v209 = vunpack.c.l.b16 %v138
    %v210 = vunpack.c.l.b16 %v139
    %v211 = vunpack.c.l.b16 %v140
    %v212 = vunpack.c.l.b16 %v141
    %v213 = vunpack.c.l.b16 %v142
    %v214 = vunpack.c.l.b16 %v143
    %v215 = vunpack.c.l.b16 %v144
    %v216 = vunpack.c.l.b16 %v145
    %v217 = vunpack.c.l.b16 %v146
    %v218 = vunpack.c.l.b16 %v147
    %v219 = vpack.c.b16 %v188, %v187
    %v220 = vpack.c.b16 %v190, %v189
    %v221 = vpack.c.b16 %v192, %v191
    %v222 = vpack.c.b16 %v194, %v193
    %v223 = vpack.c.b16 %v196, %v195
    %v224 = vpack.c.b16 %v198, %v197
    %v225 = vpack.c.b16 %v200, %v199
    %v226 = vpack.c.b16 %v202, %v201
    %v227 = vpack.c.b16 %v204, %v203
    %v228 = vpack.c.b16 %v206, %v205
    %v229 = vpack.c.b16 %v208, %v207
    %v230 = vpack.c.b16 %v210, %v209
    %v231 = vpack.c.b16 %v212, %v211
    %v232 = vpack.c.b16 %v214, %v213
    %v233 = vpack.c.b16 %v216, %v215
    %v234 = vpack.c.b16 %v218, %v217
    %251 = vmatprep.subr.bf16.mxu0 0
    %252 = vmatpush1.bf16.msra.mxu0 %v219
    %253 = vmatprep.subr.bf16.mxu0 0
    %254 = vmatpush1.bf16.msra.mxu0 %v220
    %255 = vmatprep.subr.bf16.mxu0 0
    %256 = vmatpush1.bf16.msra.mxu0 %v221
    %257 = vmatprep.subr.bf16.mxu0 0
    %258 = vmatpush1.bf16.msra.mxu0 %v222
    %259 = vmatprep.subr.bf16.mxu0 0
    %260 = vmatpush1.bf16.msra.mxu0 %v223
    %261 = vmatprep.subr.bf16.mxu0 0
    %262 = vmatpush1.bf16.msra.mxu0 %v224
    %263 = vmatprep.subr.bf16.mxu0 0
    %264 = vmatpush1.bf16.msra.mxu0 %v225
    %265 = vmatprep.subr.bf16.mxu0 0
    %266 = vmatpush1.bf16.msra.mxu0 %v226
    %267 = vmatprep.subr.bf16.mxu0 0
    %268 = vmatpush1.bf16.msra.mxu0 %v227
    %269 = vmatprep.subr.bf16.mxu0 0
    %270 = vmatpush1.bf16.msra.mxu0 %v228
    %271 = vmatprep.subr.bf16.mxu0 0
    %272 = vmatpush1.bf16.msra.mxu0 %v229
    %273 = vmatprep.subr.bf16.mxu0 0
    %274 = vmatpush1.bf16.msra.mxu0 %v230
    %275 = vmatprep.subr.bf16.mxu0 0
    %276 = vmatpush1.bf16.msra.mxu0 %v231
    %277 = vmatprep.subr.bf16.mxu0 0
    %278 = vmatpush1.bf16.msra.mxu0 %v232
    %279 = vmatprep.subr.bf16.mxu0 0
    %280 = vmatpush1.bf16.msra.mxu0 %v233
    %281 = vmatprep.subr.bf16.mxu0 0
    %282 = vmatpush1.bf16.msra.mxu0 %v234
    %283 = vmatprep.mubr.bf16.mxu0 %v115
    %284 = vmatmul.mubr.bf16.gmra.mrb[0].mxu0 %v114
    %v285 = vpop.f32.mrb[0].mxu0
    %v286 = vadd.f32 %v153, %v285
    %v287 = vpop.f32.mrb[0].mxu0
    %v288 = vpop.f32.mrb[0].mxu0
    %v289 = vpop.f32.mrb[0].mxu0
    %290 = vdwg.mxu0
    %v291 = vmax.f32 %v286, 0.0
    %v292 = vpack.c.bf16 %v291, %v291
    %v293 = vld [vmem:[%s5] sm:$0xf]
    %v294 = vld [vmem:[%s5 + $0x4] sm:$0xf]
    %v295 = vld [vmem:[%s5 + $0x8] sm:$0xf]
    %v296 = vld [vmem:[%s5 + $0xc] sm:$0xf]
    %v297 = vld [vmem:[%s5 + $0x10] sm:$0xf]
    %v298 = vld [vmem:[%s5 + $0x14] sm:$0xf]
    %v299 = vld [vmem:[%s5 + $0x18] sm:$0xf]
    %v300 = vld [vmem:[%s5 + $0x1c] sm:$0xf]
    %v301 = vld [vmem:[%s5 + $0x20] sm:$0xf]
    %v302 = vld [vmem:[%s5 + $0x24] sm:$0xf]
    %v303 = vld [vmem:[%s5 + $0x28] sm:$0xf]
    %v304 = vld [vmem:[%s5 + $0x2c] sm:$0xf]
    %v305 = vld [vmem:[%s5 + $0x30] sm:$0xf]
    %v306 = vld [vmem:[%s5 + $0x34] sm:$0xf]
    %v307 = vld [vmem:[%s5 + $0x38] sm:$0xf]
    %v308 = vld [vmem:[%s5 + $0x3c] sm:$0xf]
    %v309 = vld [vmem:[%s6] sm:$0x1]
    %v311 = vlaneseq
    %v312 = vshrl.u32 %v311, 7
    %v313 = vsub.s32 0, %v312
    %v314 = vrot.slane %v309, %v313
    %v332 = vunpack.c.l.b16 %v293
    %v333 = vunpack.c.l.b16 %v294
    %v334 = vunpack.c.l.b16 %v295
    %v335 = vunpack.c.l.b16 %v296
    %v336 = vunpack.c.l.b16 %v297
    %v337 = vunpack.c.l.b16 %v298
    %v338 = vunpack.c.l.b16 %v299
    %v339 = vunpack.c.l.b16 %v300
    %v340 = vunpack.c.l.b16 %v301
    %v341 = vunpack.c.l.b16 %v302
    %v342 = vunpack.c.l.b16 %v303
    %v343 = vunpack.c.l.b16 %v304
    %v344 = vunpack.c.l.b16 %v305
    %v345 = vunpack.c.l.b16 %v306
    %v346 = vunpack.c.l.b16 %v307
    %v347 = vunpack.c.l.b16 %v308
    %v348 = vpack.c.b16 %v333, %v332
    %v349 = vpack.c.b16 %v335, %v334
    %v350 = vpack.c.b16 %v337, %v336
    %v351 = vpack.c.b16 %v339, %v338
    %v352 = vpack.c.b16 %v341, %v340
    %v353 = vpack.c.b16 %v343, %v342
    %v354 = vpack.c.b16 %v345, %v344
    %v355 = vpack.c.b16 %v347, %v346
    %364 = vmatprep.subr.bf16.mxu0 0
    %365 = vmatpush1.bf16.msra.mxu0 %v348
    %366 = vmatprep.subr.bf16.mxu0 0
    %367 = vmatpush1.bf16.msra.mxu0 %v349
    %368 = vmatprep.subr.bf16.mxu0 0
    %369 = vmatpush1.bf16.msra.mxu0 %v350
    %370 = vmatprep.subr.bf16.mxu0 0
    %371 = vmatpush1.bf16.msra.mxu0 %v351
    %372 = vmatprep.subr.bf16.mxu0 0
    %373 = vmatpush1.bf16.msra.mxu0 %v352
    %374 = vmatprep.subr.bf16.mxu0 0
    %375 = vmatpush1.bf16.msra.mxu0 %v353
    %376 = vmatprep.subr.bf16.mxu0 0
    %377 = vmatpush1.bf16.msra.mxu0 %v354
    %378 = vmatprep.subr.bf16.mxu0 0
    %379 = vmatpush1.bf16.msra.mxu0 %v355
    %380 = vmatprep.subr.bf16.mxu0 0
    %381 = vmatpush1.bf16.msra.mxu0 0
    %382 = vmatprep.subr.bf16.mxu0 0
    %383 = vmatpush1.bf16.msra.mxu0 0
    %384 = vmatprep.subr.bf16.mxu0 0
    %385 = vmatpush1.bf16.msra.mxu0 0
    %386 = vmatprep.subr.bf16.mxu0 0
    %387 = vmatpush1.bf16.msra.mxu0 0
    %388 = vmatprep.subr.bf16.mxu0 0
    %389 = vmatpush1.bf16.msra.mxu0 0
    %390 = vmatprep.subr.bf16.mxu0 0
    %391 = vmatpush1.bf16.msra.mxu0 0
    %392 = vmatprep.subr.bf16.mxu0 0
    %393 = vmatpush1.bf16.msra.mxu0 0
    %394 = vmatprep.subr.bf16.mxu0 0
    %395 = vmatpush1.bf16.msra.mxu0 0
    %396 = vmatprep.mubr.bf16.mxu0 0
    %397 = vmatmul.mubr.bf16.gmra.mrb[0].mxu0 %v292
    %v398 = vpop.f32.mrb[0].mxu0
    %v399 = vadd.f32 %v314, %v398
    %v400 = vpop.f32.mrb[0].mxu0
    %v401 = vpop.f32.mrb[0].mxu0
    %v402 = vpop.f32.mrb[0].mxu0
    %403 = vdwg.mxu0
    %v404 = vtanh.pop %v399
    %vm405 = vcmask 31744
    %406 = vst.msk [vmem:[%s7] sm:$0xff] %vm405, %v404
    // Predicated region
    $region34: #{tpu_custom_call.1} parent=1 // pred_check
      _
    $region35: #{tpu_custom_call.1} parent=1 // pred_check_branch
      %408 = sbr.rel (0) target = $region37
    $region36: #{tpu_custom_call.1} parent=1 // pred_region
      _
    $region37: #{tpu_custom_call.1} parent=1 // pred_fallthru
      _
    // Predicated region
    $region38: #{tpu_custom_call.1} parent=1 // pred_check
      _
    $region39: #{tpu_custom_call.1} parent=1 // pred_check_branch
      %410 = sbr.rel (0) target = $region41
    $region40: #{tpu_custom_call.1} parent=1 // pred_region
      _
    $region41: #{tpu_custom_call.1} parent=1 // pred_fallthru
      _
    %411 = vsyncpa [#allocation3], 1

</llo_original>
